<compile_context>
chip_gen: v6e
topology: v6e:2x2x1
jax: 0.10.0
libtpu: 0.0.40
codegen_flags: <defaults>
</compile_context>

<pallas_src>
import math
from functools import partial

import jax
import jax.numpy as jnp
from jax.experimental import pallas as pl
from jax.experimental.pallas import tpu as pltpu


def _linear_kernel(x_ref, w_ref, o_ref, *, alpha):
    # x_ref: (tile_rows, K), w_ref: (K, M_pad), o_ref: (tile_rows, M_pad)
    # Fold e3nn path normalization (1/sqrt(fan_in)) into the small weight tile.
    w = w_ref[...].astype(jnp.float32) * alpha
    acc = jnp.dot(
        x_ref[...].astype(jnp.float32), w, preferred_element_type=jnp.float32
    )
    o_ref[...] = acc.astype(o_ref.dtype)


def _pick_tile_rows(n_rows, k, m_pad, itemsize, *, vmem_budget_bytes=8 << 20,
                    max_tile=2048):
    """Largest multiple-of-8 row tile whose double-buffered in/out blocks
    (plus the resident weight) fit a conservative VMEM budget."""
    weight_bytes = 2 * k * m_pad * itemsize          # double-buffered (constant map)
    budget = max(vmem_budget_bytes - weight_bytes, 1 << 20)
    bytes_per_row = 2 * (k + m_pad) * itemsize       # in + out blocks, x2 pipeline bufs
    cap = max(8, (budget // bytes_per_row) // 8 * 8)
    tile = min(max_tile, cap)
    n8 = ((n_rows + 7) // 8) * 8                     # small inputs -> single block
    return max(8, min(tile, n8))


def linear_node_embedding(node_attrs, weight, *, alpha=None):
    """node_attrs: (N, K), weight: (K, M) -> (N, M); out = x @ W / sqrt(K)."""
    n, k = node_attrs.shape
    k_w, m = weight.shape
    assert k == k_w, "weight fan-in must match node_attrs feature dim"
    if alpha is None:
        alpha = 1.0 / math.sqrt(k)                   # e3nn path normalization

    # Lane-dense output: pad the output channel dim up to a multiple of 128.
    m_pad = pl.cdiv(m, 128) * 128
    w = weight if m_pad == m else jnp.pad(weight, ((0, 0), (0, m_pad - m)))

    # Row tiling: pad N up to a multiple of the chosen tile (zero rows).
    itemsize = jnp.dtype(node_attrs.dtype).itemsize
    tile_rows = _pick_tile_rows(n, k, m_pad, itemsize)
    n_pad = pl.cdiv(n, tile_rows) * tile_rows
    x = node_attrs if n_pad == n else jnp.pad(node_attrs, ((0, n_pad - n), (0, 0)))

    out = pl.pallas_call(
        partial(_linear_kernel, alpha=float(alpha)),
        out_shape=jax.ShapeDtypeStruct((n_pad, m_pad), node_attrs.dtype),
        grid_spec=pltpu.PrefetchScalarGridSpec(
            num_scalar_prefetch=0,
            grid=(n_pad // tile_rows,),
            in_specs=[
                pl.BlockSpec((tile_rows, k), lambda i: (i, 0)),   # node rows stream
                pl.BlockSpec((k, m_pad), lambda i: (0, 0)),       # weight resident
            ],
            out_specs=pl.BlockSpec((tile_rows, m_pad), lambda i: (i, 0)),
        ),
        compiler_params=pltpu.CompilerParams(
            dimension_semantics=("parallel",),     # shard rows across v7x's 2 TCs
        ),
    )(x, w)

    if n_pad != n or m_pad != m:
        out = out[:n, :m]
    return out


def linear_node_embedding_ref(node_attrs, weight, *, alpha=None):
    k = node_attrs.shape[1]
    if alpha is None:
        alpha = 1.0 / math.sqrt(k)
    return (node_attrs @ weight) * jnp.asarray(alpha, node_attrs.dtype)


if __name__ == "__main__":
    key = jax.random.PRNGKey(0)
    k_species, k_weight = jax.random.split(key)

    num_nodes = 200       # deliberately not a power of two (exercises padding path)
    num_elements = 16     # irreps_in  = "16x0e"  (one-hot element encoding)
    out_channels = 128    # irreps_out = "128x0e" (node feature width)

    species = jax.random.randint(k_species, (num_nodes,), 0, num_elements)
    node_attrs = jax.nn.one_hot(species, num_elements, dtype=jnp.float32)
    # e3nn o3.Linear internal weights ~ Normal(0, 1); normalization in forward.
    weight = jax.random.normal(k_weight, (num_elements, out_channels),
                               dtype=jnp.float32)

    out = linear_node_embedding(node_attrs, weight)
    out = jax.block_until_ready(out)

    ref = linear_node_embedding_ref(node_attrs, weight)
    assert out.shape == ref.shape and out.dtype == ref.dtype
    assert jnp.allclose(out, ref, atol=1e-5, rtol=1e-5)
    print("KERNEL_OK")
</pallas_src>

<mosaic_0001>
module attributes {stable_mosaic.version = 11 : i64} {
  func.func @_linear_kernel(%arg0: i32, %arg1: memref<200x16xf32, #tpu.memory_space<vmem>>, %arg2: memref<16x128xf32, #tpu.memory_space<vmem>>, %arg3: memref<200x128xf32, #tpu.memory_space<vmem>>) attributes {dimension_semantics = [#tpu.dimension_semantics<parallel>], iteration_bounds = array<i64: 1>, scalar_prefetch = 0 : i64, scratch_operands = 0 : i64, tpu.core_type = #tpu.core_type<tc>, window_params = [{transform_indices = @transform_0, window_bounds = array<i64: 200, 16>}, {pipeline_mode = #tpu.pipeline_mode<synchronous>, transform_indices = @transform_1, window_bounds = array<i64: 16, 128>}, {transform_indices = @transform_2, window_bounds = array<i64: 200, 128>}]} {
    %c0 = arith.constant 0 : index
    %c0_0 = arith.constant 0 : index
    %0 = vector.load %arg2[%c0, %c0_0] : memref<16x128xf32, #tpu.memory_space<vmem>>, vector<16x128xf32>
    %cst = arith.constant 2.500000e-01 : f32
    %1 = vector.broadcast %cst : f32 to vector<16x128xf32>
    %2 = arith.mulf %0, %1 : vector<16x128xf32>
    %c0_1 = arith.constant 0 : index
    %c0_2 = arith.constant 0 : index
    %3 = vector.load %arg1[%c0_1, %c0_2] : memref<200x16xf32, #tpu.memory_space<vmem>>, vector<200x16xf32>
    %cst_3 = arith.constant dense<0.000000e+00> : vector<200x128xf32>
    %4 = tpu.matmul %3, %2, %cst_3 {dimension_numbers = #tpu.dot_dimension_numbers<[1], [0], [0], [1], [0, 0, 1, 1], [], []>} : vector<200x16xf32>, vector<16x128xf32>, vector<200x128xf32> -> vector<200x128xf32>
    %c0_4 = arith.constant 0 : index
    %c0_5 = arith.constant 0 : index
    %5 = vector.load %arg3[%c0_4, %c0_5] : memref<200x128xf32, #tpu.memory_space<vmem>>, vector<200x128xf32>
    tpu.vector_store %arg3[%c0_4, %c0_5], %4 {strides = array<i32>} : memref<200x128xf32, #tpu.memory_space<vmem>>, vector<200x128xf32>,
    return
  }
  func.func @transform_0(%arg0: i32) -> (i32, i32) {
    %c0_i32 = arith.constant 0 : i32
    %c0_i32_0 = arith.constant 0 : i32
    return %arg0, %c0_i32 : i32, i32
  }
  func.func @transform_1(%arg0: i32) -> (i32, i32) {
    %c0_i32 = arith.constant 0 : i32
    %c0_i32_0 = arith.constant 0 : i32
    %c0_i32_1 = arith.constant 0 : i32
    return %c0_i32, %c0_i32_0 : i32, i32
  }
  func.func @transform_2(%arg0: i32) -> (i32, i32) {
    %c0_i32 = arith.constant 0 : i32
    %c0_i32_0 = arith.constant 0 : i32
    return %arg0, %c0_i32 : i32, i32
  }
}

</mosaic_0001>

<llo_original>
// kernel: tpu_custom_call.1
$region0: #{tpu_custom_call.1}
  #allocation0 [shape = 'u32[]', space=smem, size = 0x4, offset = 0x4, fixed_abs, tag = 'smem constant byte address 0x4 - core index']
  #allocation1 [shape = 'u32[144,128]{1,0:T(1,128)}', space=vmem, size = 0x12000, scoped, tag = 'internal scratch']
  %s0 = inlined_call_operand.vmem [shape: f32[200,16], index: 0, kind: input, shape index: {}]
  %s1 = inlined_call_operand.vmem [shape: f32[16,128], index: 1, kind: input, shape index: {}]
  %s2 = inlined_call_operand.hbm [shape: f32[200,128], index: 2, kind: output, shape index: {}]
  %s3 = sld [smem:[#allocation0]]
  $region18: #{tpu_custom_call.1} parent=0
    _
  %s5 = ssub.s32 1, %s3
  %s6 = scalar_select 0, %s5, %s3
  $region1: #{tpu_custom_call.1} parent=0
    #allocation2 [shape = 'u8[102400]{0}', space=vmem, size = 0x19000, scoped, tag = 'output window, operand 0, single buffered']
    #allocation3 [shape = 's32[1]{0}', space=sflag, size = 0x4, scoped, tag = 'scoped memory for tpu_custom_call.1']
    %7 = vsyncpa [#allocation3], 0
    // Predicated region
    $region2: #{tpu_custom_call.1} parent=1 // pred_check
      _
    $region3: #{tpu_custom_call.1} parent=1 // pred_check_branch
      %9 = sbr.rel (0) target = $region5
    $region4: #{tpu_custom_call.1} parent=1 // pred_region
      _
    $region5: #{tpu_custom_call.1} parent=1 // pred_fallthru
      _
    // Predicated region
    $region6: #{tpu_custom_call.1} parent=1 // pred_check
      _
    $region7: #{tpu_custom_call.1} parent=1 // pred_check_branch
      %11 = sbr.rel (0) target = $region9
    $region8: #{tpu_custom_call.1} parent=1 // pred_region
      _
    $region9: #{tpu_custom_call.1} parent=1 // pred_fallthru
      _
    %v12 = vld [vmem:[%s1] sm:$0xff]
    %v13 = vld [vmem:[%s1 + $0x8] sm:$0xff]
    %v14 = vmul.f32 %v12, 0.25
    %v15 = vmul.f32 %v13, 0.25
    %v16 = vld [vmem:[%s0] sm:$0xff]
    %v17 = vld [vmem:[%s0 + $0x8] sm:$0xff]
    %v18 = vld [vmem:[%s0 + $0x10] sm:$0xff]
    %v19 = vld [vmem:[%s0 + $0x18] sm:$0xff]
    %v20 = vld [vmem:[%s0 + $0x20] sm:$0xff]
    %v21 = vld [vmem:[%s0 + $0x28] sm:$0xff]
    %v22 = vld [vmem:[%s0 + $0x30] sm:$0xff]
    %v23 = vld [vmem:[%s0 + $0x38] sm:$0xff]
    %v24 = vld [vmem:[%s0 + $0x40] sm:$0xff]
    %v25 = vld [vmem:[%s0 + $0x48] sm:$0xff]
    %v26 = vld [vmem:[%s0 + $0x50] sm:$0xff]
    %v27 = vld [vmem:[%s0 + $0x58] sm:$0xff]
    %v28 = vld [vmem:[%s0 + $0x60] sm:$0xff]
    %v29 = vld [vmem:[%s0 + $0x68] sm:$0xff]
    %v30 = vld [vmem:[%s0 + $0x70] sm:$0xff]
    %v31 = vld [vmem:[%s0 + $0x78] sm:$0xff]
    %v32 = vld [vmem:[%s0 + $0x80] sm:$0xff]
    %v33 = vld [vmem:[%s0 + $0x88] sm:$0xff]
    %v34 = vld [vmem:[%s0 + $0x90] sm:$0xff]
    %v35 = vld [vmem:[%s0 + $0x98] sm:$0xff]
    %v36 = vld [vmem:[%s0 + $0xa0] sm:$0xff]
    %v37 = vld [vmem:[%s0 + $0xa8] sm:$0xff]
    %v38 = vld [vmem:[%s0 + $0xb0] sm:$0xff]
    %v39 = vld [vmem:[%s0 + $0xb8] sm:$0xff]
    %v40 = vld [vmem:[%s0 + $0xc0] sm:$0xff]
    %vm41 = vcmask 130048
    %v43 = vsel %vm41, %v16, 0
    %v46 = vsel %vm41, %v17, 0
    %v49 = vsel %vm41, %v18, 0
    %v52 = vsel %vm41, %v19, 0
    %v55 = vsel %vm41, %v20, 0
    %v58 = vsel %vm41, %v21, 0
    %v61 = vsel %vm41, %v22, 0
    %v64 = vsel %vm41, %v23, 0
    %v67 = vsel %vm41, %v24, 0
    %v70 = vsel %vm41, %v25, 0
    %v73 = vsel %vm41, %v26, 0
    %v76 = vsel %vm41, %v27, 0
    %v79 = vsel %vm41, %v28, 0
    %v82 = vsel %vm41, %v29, 0
    %v85 = vsel %vm41, %v30, 0
    %v88 = vsel %vm41, %v31, 0
    %v91 = vsel %vm41, %v32, 0
    %v94 = vsel %vm41, %v33, 0
    %v97 = vsel %vm41, %v34, 0
    %v100 = vsel %vm41, %v35, 0
    %v103 = vsel %vm41, %v36, 0
    %v106 = vsel %vm41, %v37, 0
    %v109 = vsel %vm41, %v38, 0
    %v112 = vsel %vm41, %v39, 0
    %v115 = vsel %vm41, %v40, 0
    %117 = vmatprep.subr.mxu0 0.0
    %118 = vmatpush1.msra.mxu0 0.0
    %119 = vmatprep.subr.mxu0 0.0
    %120 = vmatpush1.msra.mxu0 0.0
    %121 = vmatprep.subr.mxu0 0.0
    %122 = vmatpush1.msra.mxu0 0.0
    %123 = vmatprep.subr.mxu0 0.0
    %124 = vmatpush1.msra.mxu0 0.0
    %125 = vmatprep.subr.mxu0 0.0
    %126 = vmatpush1.msra.mxu0 0.0
    %127 = vmatprep.subr.mxu0 0.0
    %128 = vmatpush1.msra.mxu0 0.0
    %129 = vmatprep.subr.mxu0 0.0
    %130 = vmatpush1.msra.mxu0 0.0
    %131 = vmatprep.subr.mxu0 0.0
    %132 = vmatpush1.msra.mxu0 0.0
    %133 = vmatprep.subr.mxu0 0.0
    %134 = vmatpush1.msra.mxu0 0.0
    %135 = vmatprep.subr.mxu0 0.0
    %136 = vmatpush1.msra.mxu0 0.0
    %137 = vmatprep.subr.mxu0 0.0
    %138 = vmatpush1.msra.mxu0 0.0
    %139 = vmatprep.subr.mxu0 0.0
    %140 = vmatpush1.msra.mxu0 0.0
    %141 = vmatprep.subr.mxu0 0.0
    %142 = vmatpush1.msra.mxu0 0.0
    %143 = vmatprep.subr.mxu0 0.0
    %144 = vmatpush1.msra.mxu0 0.0
    %145 = vmatprep.subr.mxu0 0.0
    %146 = vmatpush1.msra.mxu0 %v15
    %147 = vmatprep.subr.mxu0 0.0
    %148 = vmatpush1.msra.mxu0 %v14
    %149 = vmatprep.subr.mxu0 0.0
    %150 = vmatpush2.msra.mxu0 0.0
    %151 = vmatprep.subr.mxu0 0.0
    %152 = vmatpush2.msra.mxu0 0.0
    %153 = vmatprep.subr.mxu0 0.0
    %154 = vmatpush2.msra.mxu0 0.0
    %155 = vmatprep.subr.mxu0 0.0
    %156 = vmatpush2.msra.mxu0 0.0
    %157 = vmatprep.subr.mxu0 0.0
    %158 = vmatpush2.msra.mxu0 0.0
    %159 = vmatprep.subr.mxu0 0.0
    %160 = vmatpush2.msra.mxu0 0.0
    %161 = vmatprep.subr.mxu0 0.0
    %162 = vmatpush2.msra.mxu0 0.0
    %163 = vmatprep.subr.mxu0 0.0
    %164 = vmatpush2.msra.mxu0 0.0
    %165 = vmatprep.subr.mxu0 0.0
    %166 = vmatpush2.msra.mxu0 0.0
    %167 = vmatprep.subr.mxu0 0.0
    %168 = vmatpush2.msra.mxu0 0.0
    %169 = vmatprep.subr.mxu0 0.0
    %170 = vmatpush2.msra.mxu0 0.0
    %171 = vmatprep.subr.mxu0 0.0
    %172 = vmatpush2.msra.mxu0 0.0
    %173 = vmatprep.subr.mxu0 0.0
    %174 = vmatpush2.msra.mxu0 0.0
    %175 = vmatprep.subr.mxu0 0.0
    %176 = vmatpush2.msra.mxu0 0.0
    %177 = vmatprep.subr.mxu0 0.0
    %178 = vmatpush2.msra.mxu0 0.0
    %179 = vmatprep.subr.mxu0 0.0
    %180 = vmatpush2.msra.mxu0 0.0
    %181 = vmatprep.mubr.f32.mxu0 0.0
    %182 = vmatmul.mubr.f32.gmra.mxu0 %v43
    %v183 = vpop.f32.mrf.mxu0
    %v184 = vadd.f32 0.0, %v183
    %v185 = vpop.f32.mrf.mxu0
    %186 = vmatprep.mubr.f32.mxu0 0.0
    %187 = vmatmul.mubr.f32.gmra.mxu0 %v46
    %v188 = vpop.f32.mrf.mxu0
    %v189 = vadd.f32 0.0, %v188
    %v190 = vpop.f32.mrf.mxu0
    %191 = vmatprep.mubr.f32.mxu0 0.0
    %192 = vmatmul.mubr.f32.gmra.mxu0 %v49
    %v193 = vpop.f32.mrf.mxu0
    %v194 = vadd.f32 0.0, %v193
    %v195 = vpop.f32.mrf.mxu0
    %196 = vmatprep.mubr.f32.mxu0 0.0
    %197 = vmatmul.mubr.f32.gmra.mxu0 %v52
    %v198 = vpop.f32.mrf.mxu0
    %v199 = vadd.f32 0.0, %v198
    %v200 = vpop.f32.mrf.mxu0
    %201 = vmatprep.mubr.f32.mxu0 0.0
    %202 = vmatmul.mubr.f32.gmra.mxu0 %v55
    %v203 = vpop.f32.mrf.mxu0
    %v204 = vadd.f32 0.0, %v203
    %v205 = vpop.f32.mrf.mxu0
    %206 = vmatprep.mubr.f32.mxu0 0.0
    %207 = vmatmul.mubr.f32.gmra.mxu0 %v58
    %v208 = vpop.f32.mrf.mxu0
    %v209 = vadd.f32 0.0, %v208
    %v210 = vpop.f32.mrf.mxu0
    %211 = vmatprep.mubr.f32.mxu0 0.0
    %212 = vmatmul.mubr.f32.gmra.mxu0 %v61
    %v213 = vpop.f32.mrf.mxu0
    %v214 = vadd.f32 0.0, %v213
    %v215 = vpop.f32.mrf.mxu0
    %216 = vmatprep.mubr.f32.mxu0 0.0
    %217 = vmatmul.mubr.f32.gmra.mxu0 %v64
    %v218 = vpop.f32.mrf.mxu0
    %v219 = vadd.f32 0.0, %v218
    %v220 = vpop.f32.mrf.mxu0
    %221 = vmatprep.mubr.f32.mxu0 0.0
    %222 = vmatmul.mubr.f32.gmra.mxu0 %v67
    %v223 = vpop.f32.mrf.mxu0
    %v224 = vadd.f32 0.0, %v223
    %v225 = vpop.f32.mrf.mxu0
    %226 = vmatprep.mubr.f32.mxu0 0.0
    %227 = vmatmul.mubr.f32.gmra.mxu0 %v70
    %v228 = vpop.f32.mrf.mxu0
    %v229 = vadd.f32 0.0, %v228
    %v230 = vpop.f32.mrf.mxu0
    %231 = vmatprep.mubr.f32.mxu0 0.0
    %232 = vmatmul.mubr.f32.gmra.mxu0 %v73
    %v233 = vpop.f32.mrf.mxu0
    %v234 = vadd.f32 0.0, %v233
    %v235 = vpop.f32.mrf.mxu0
    %236 = vmatprep.mubr.f32.mxu0 0.0
    %237 = vmatmul.mubr.f32.gmra.mxu0 %v76
    %v238 = vpop.f32.mrf.mxu0
    %v239 = vadd.f32 0.0, %v238
    %v240 = vpop.f32.mrf.mxu0
    %241 = vmatprep.mubr.f32.mxu0 0.0
    %242 = vmatmul.mubr.f32.gmra.mxu0 %v79
    %v243 = vpop.f32.mrf.mxu0
    %v244 = vadd.f32 0.0, %v243
    %v245 = vpop.f32.mrf.mxu0
    %246 = vmatprep.mubr.f32.mxu0 0.0
    %247 = vmatmul.mubr.f32.gmra.mxu0 %v82
    %v248 = vpop.f32.mrf.mxu0
    %v249 = vadd.f32 0.0, %v248
    %v250 = vpop.f32.mrf.mxu0
    %251 = vmatprep.mubr.f32.mxu0 0.0
    %252 = vmatmul.mubr.f32.gmra.mxu0 %v85
    %v253 = vpop.f32.mrf.mxu0
    %v254 = vadd.f32 0.0, %v253
    %v255 = vpop.f32.mrf.mxu0
    %256 = vmatprep.mubr.f32.mxu0 0.0
    %257 = vmatmul.mubr.f32.gmra.mxu0 %v88
    %v258 = vpop.f32.mrf.mxu0
    %v259 = vadd.f32 0.0, %v258
    %v260 = vpop.f32.mrf.mxu0
    %261 = vmatprep.mubr.f32.mxu0 0.0
    %262 = vmatmul.mubr.f32.gmra.mxu0 %v91
    %v263 = vpop.f32.mrf.mxu0
    %v264 = vadd.f32 0.0, %v263
    %v265 = vpop.f32.mrf.mxu0
    %266 = vmatprep.mubr.f32.mxu0 0.0
    %267 = vmatmul.mubr.f32.gmra.mxu0 %v94
    %v268 = vpop.f32.mrf.mxu0
    %v269 = vadd.f32 0.0, %v268
    %v270 = vpop.f32.mrf.mxu0
    %271 = vmatprep.mubr.f32.mxu0 0.0
    %272 = vmatmul.mubr.f32.gmra.mxu0 %v97
    %v273 = vpop.f32.mrf.mxu0
    %v274 = vadd.f32 0.0, %v273
    %v275 = vpop.f32.mrf.mxu0
    %276 = vmatprep.mubr.f32.mxu0 0.0
    %277 = vmatmul.mubr.f32.gmra.mxu0 %v100
    %v278 = vpop.f32.mrf.mxu0
    %v279 = vadd.f32 0.0, %v278
    %v280 = vpop.f32.mrf.mxu0
    %281 = vmatprep.mubr.f32.mxu0 0.0
    %282 = vmatmul.mubr.f32.gmra.mxu0 %v103
    %v283 = vpop.f32.mrf.mxu0
    %v284 = vadd.f32 0.0, %v283
    %v285 = vpop.f32.mrf.mxu0
    %286 = vmatprep.mubr.f32.mxu0 0.0
    %287 = vmatmul.mubr.f32.gmra.mxu0 %v106
    %v288 = vpop.f32.mrf.mxu0
    %v289 = vadd.f32 0.0, %v288
    %v290 = vpop.f32.mrf.mxu0
    %291 = vmatprep.mubr.f32.mxu0 0.0
    %292 = vmatmul.mubr.f32.gmra.mxu0 %v109
    %v293 = vpop.f32.mrf.mxu0
    %v294 = vadd.f32 0.0, %v293
    %v295 = vpop.f32.mrf.mxu0
    %296 = vmatprep.mubr.f32.mxu0 0.0
    %297 = vmatmul.mubr.f32.gmra.mxu0 %v112
    %v298 = vpop.f32.mrf.mxu0
    %v299 = vadd.f32 0.0, %v298
    %v300 = vpop.f32.mrf.mxu0
    %301 = vmatprep.mubr.f32.mxu0 0.0
    %302 = vmatmul.mubr.f32.gmra.mxu0 %v115
    %v303 = vpop.f32.mrf.mxu0
    %v304 = vadd.f32 0.0, %v303
    %v305 = vpop.f32.mrf.mxu0
    %306 = vdwg.mxu0
    %307 = vst [vmem:[#allocation2] sm:$0xff] %v184
    %308 = vst [vmem:[#allocation2 + $0x8] sm:$0xff] %v189
    %309 = vst [vmem:[#allocation2 + $0x10] sm:$0xff] %v194
    %310 = vst [vmem:[#allocation2 + $0x18] sm:$0xff] %v199
    %311 = vst [vmem:[#allocation2 + $0x20] sm:$0xff] %v204
    %312 = vst [vmem:[#allocation2 + $0x28] sm:$0xff] %v209
    %313 = vst [vmem:[#allocation2 + $0x30] sm:$0xff] %v214
    %314 = vst [vmem:[#allocation2 + $0x38] sm:$0xff] %v219
    %315 = vst [vmem:[#allocation2 + $0x40] sm:$0xff] %v224
    %316 = vst [vmem:[#allocation2 + $0x48] sm:$0xff] %v229
    %317 = vst [vmem:[#allocation2 + $0x50] sm:$0xff] %v234
    %318 = vst [vmem:[#allocation2 + $0x58] sm:$0xff] %v239
    %319 = vst [vmem:[#allocation2 + $0x60] sm:$0xff] %v244
    %320 = vst [vmem:[#allocation2 + $0x68] sm:$0xff] %v249
    %321 = vst [vmem:[#allocation2 + $0x70] sm:$0xff] %v254
    %322 = vst [vmem:[#allocation2 + $0x78] sm:$0xff] %v259
    %323 = vst [vmem:[#allocation2 + $0x80] sm:$0xff] %v264
    %324 = vst [vmem:[#allocation2 + $0x88] sm:$0xff] %v269
    %325 = vst [vmem:[#allocation2 + $0x90] sm:$0xff] %v274
    %326 = vst [vmem:[#allocation2 + $0x98] sm:$0xff] %v279
    %327 = vst [vmem:[#allocation2 + $0xa0] sm:$0xff] %v284
    %328 = vst [vmem:[#allocation2 + $0xa8] sm:$0xff] %v289
    %329 = vst [vmem:[#allocation2 + $0xb0] sm:$0xff] %v294
    %330 = vst [vmem:[#allocation2 + $0xb8] sm:$0xff] %v299
    %331 = vst [vmem:[#allocation2 + $0xc0] sm:$0xff] %v304
    // Predicated region
    $region10: #{tpu_custom_call.1} parent=1 // pred_check
      _
    $region11: #{tpu_custom_call.1} parent=1 // pred_check_branch
      %333 = sbr.rel (0) target = $region13
    $region12: #{tpu_custom_call.1} parent=1 // pred_region
      %s335 = ssub.s32 3200, 3200
      %336 = vsyncadd [#allocation3], %s335
      %s337 = sshll.u32 [#allocation2], 4
      %s338 = int_to_ptr.vmem [resolvable:$true] %s337
      %343 = dma.vmem_to_hbm [thread:$0]  %s338, 3200, %s2, [#allocation3], 128, 128, 8
    $region13: #{tpu_custom_call.1} parent=1 // pred_fallthru
      _
    // Predicated region
    $region14: #{tpu_custom_call.1} parent=1 // pred_check
      _
    $region15: #{tpu_custom_call.1} parent=1 // pred_check_branch
      %345 = sbr.rel (0) target = $region17
    $region16: #{tpu_custom_call.1} parent=1 // pred_region
      %346 = dma.done [#allocation3], 3200
    $region17: #{tpu_custom_call.1} parent=1 // pred_fallthru
      _
    %347 = vsyncpa [#allocation3], 1

</llo_original>
